<compile_context>
chip_gen: v6e
topology: v6e:2x2x1
jax: 0.10.0
libtpu: 0.0.40
codegen_flags: <defaults>
</compile_context>

<pallas_src>
import jax
import jax.numpy as jnp
from jax import lax
from jax.experimental import pallas as pl
from jax.experimental.pallas import tpu as pltpu


def _round_up(x, m):
    return (x + m - 1) // m * m


def _conv1d_relu_kernel(x_ref, w_ref, b_ref, o_ref):
    # x_ref: (1, KC_PAD, TL)    im2col'd input tile: contraction on sublanes, time on lanes
    # w_ref: (COUT_PAD, KC_PAD) full weight matrix (tiny, VMEM-resident)
    # b_ref: (COUT_PAD, 1)      zero-padded bias column
    # o_ref: (1, COUT_PAD, TL)  output tile already in (C_out, L) order
    acc = jnp.dot(w_ref[...], x_ref[0],
                  preferred_element_type=jnp.float32)      # (COUT_PAD, TL)
    acc += b_ref[...]                                       # lane-broadcast bias
    o_ref[0] = jnp.maximum(acc, 0.0).astype(o_ref.dtype)    # activation = ReLU


def conv1d_relu(x, weight, bias, *, stride, padding):
    """nn.Conv1d(n_in, n_out, K, stride, padding) + ReLU.

    x: (N, C_in, L), weight: (C_out, C_in, K), bias: (C_out,).
    Returns (N, C_out, L_out) to match PyTorch exactly.
    """
    N, C_in, L = x.shape
    C_out, _, K = weight.shape
    s, p = int(stride), int(padding)
    L_out = (L + 2 * p - K) // s + 1
    assert L_out > 0

    KC = K * C_in
    KC_PAD = _round_up(KC, 8)         # contraction dim -> sublane multiple of 8
    COUT_PAD = _round_up(C_out, 8)    # output channel dim -> sublanes (NOT 128)

    # Time tile on the lane axis: multiple of 128, grown toward 2048 for long
    # sequences, capped so double-buffered (x + out) blocks stay well inside
    # the scoped-VMEM budget on every TPU generation.
    budget_bytes = 8 * 1024 * 1024
    per_col_bytes = 4 * 2 * (KC_PAD + COUT_PAD)            # double-buffered x + out
    tl_cap = max(128, (budget_bytes // per_col_bytes) // 128 * 128)
    TL = min(2048, tl_cap, _round_up(L_out, 128))
    num_l_tiles = pl.cdiv(L_out, TL)
    L_out_pad = num_l_tiles * TL

    # Channel-major im2col on the (small) conv input: taps merged into the
    # contraction dim so the kernel is a single aligned matmul per tile.
    # x_merged[n, k*C_in + c, t] = x_pad[n, c, t*s + k]
    x_pad = jnp.pad(x, ((0, 0), (0, 0), (p, p)))
    taps = [x_pad[:, :, k:k + s * (L_out - 1) + 1:s] for k in range(K)]
    x_merged = jnp.stack(taps, axis=1).reshape(N, KC, L_out)
    x_merged = jnp.pad(x_merged,
                       ((0, 0), (0, KC_PAD - KC), (0, L_out_pad - L_out)))

    # Weights: (C_out, C_in, K) -> (C_out, K*C_in) with index k*C_in + c,
    # matching the im2col channel order; zero-pad both dims.
    w_mat = weight.transpose(0, 2, 1).reshape(C_out, KC)
    w_mat = jnp.pad(w_mat, ((0, COUT_PAD - C_out), (0, KC_PAD - KC)))
    b2 = jnp.pad(bias, (0, COUT_PAD - C_out)).reshape(COUT_PAD, 1)

    cost = pl.CostEstimate(
        flops=2 * N * L_out * C_out * C_in * K,
        transcendentals=0,
        bytes_accessed=4 * (N * KC_PAD * L_out_pad        # x_merged read
                            + COUT_PAD * KC_PAD           # weights
                            + COUT_PAD                    # bias
                            + N * COUT_PAD * L_out_pad),  # output write
    )

    out_padded = pl.pallas_call(
        _conv1d_relu_kernel,
        out_shape=jax.ShapeDtypeStruct((N, COUT_PAD, L_out_pad), x.dtype),
        grid=(N, num_l_tiles),
        in_specs=[
            # Per-tile column window: VMEM bounded independent of sequence length.
            pl.BlockSpec((1, KC_PAD, TL), lambda n, j: (n, 0, j)),
            pl.BlockSpec((COUT_PAD, KC_PAD), lambda n, j: (0, 0)),
            pl.BlockSpec((COUT_PAD, 1), lambda n, j: (0, 0)),
        ],
        out_specs=pl.BlockSpec((1, COUT_PAD, TL), lambda n, j: (n, 0, j)),
        compiler_params=pltpu.CompilerParams(
            dimension_semantics=("parallel", "parallel")),
        cost_estimate=cost,
    )(x_merged, w_mat, b2)

    # Output is already in PyTorch's (N, C_out, L_out) order; just drop padding.
    return out_padded[:, :C_out, :L_out]


if __name__ == "__main__":
    # Module hyperparameters (Conv1d): n_in=4, n_out=8, kernel_size=3, stride=1, padding=1
    n_in, n_out, kernel_size, stride, padding = 4, 8, 3, 1, 1
    batch, length = 2, 16

    key = jax.random.PRNGKey(0)
    kx, kw, kb = jax.random.split(key, 3)
    x = jax.random.normal(kx, (batch, n_in, length), dtype=jnp.float32)
    weight = jax.random.normal(kw, (n_out, n_in, kernel_size), dtype=jnp.float32) * 0.1
    bias = jax.random.normal(kb, (n_out,), dtype=jnp.float32) * 0.1

    out = conv1d_relu(x, weight, bias, stride=stride, padding=padding)
    out = jax.block_until_ready(out)

    ref = lax.conv_general_dilated(
        x, weight, window_strides=(stride,), padding=[(padding, padding)],
        dimension_numbers=("NCH", "OIH", "NCH"))
    ref = jnp.maximum(ref + bias[None, :, None], 0.0)
    assert out.shape == ref.shape
    assert jnp.allclose(out, ref, atol=1e-4, rtol=1e-4)

    # Extra check: a strided configuration exercises the strided-im2col path.
    s2, p2 = 2, 2
    out2 = conv1d_relu(x, weight, bias, stride=s2, padding=p2)
    out2 = jax.block_until_ready(out2)
    ref2 = lax.conv_general_dilated(
        x, weight, window_strides=(s2,), padding=[(p2, p2)],
        dimension_numbers=("NCH", "OIH", "NCH"))
    ref2 = jnp.maximum(ref2 + bias[None, :, None], 0.0)
    assert out2.shape == ref2.shape
    assert jnp.allclose(out2, ref2, atol=1e-4, rtol=1e-4)

    print("KERNEL_OK")
</pallas_src>

<mosaic_0001>
module attributes {stable_mosaic.version = 11 : i64} {
  func.func @_conv1d_relu_kernel(%arg0: i32, %arg1: i32, %arg2: memref<1x16x128xf32, #tpu.memory_space<vmem>>, %arg3: memref<8x16xf32, #tpu.memory_space<vmem>>, %arg4: memref<8x1xf32, #tpu.memory_space<vmem>>, %arg5: memref<1x8x128xf32, #tpu.memory_space<vmem>>) attributes {dimension_semantics = [#tpu.dimension_semantics<parallel>, #tpu.dimension_semantics<parallel>], iteration_bounds = array<i64: 2, 1>, scalar_prefetch = 0 : i64, scratch_operands = 0 : i64, tpu.core_type = #tpu.core_type<tc>, window_params = [{transform_indices = @transform_0, window_bounds = array<i64: 1, 16, 128>}, {pipeline_mode = #tpu.pipeline_mode<synchronous>, transform_indices = @transform_1, window_bounds = array<i64: 8, 16>}, {pipeline_mode = #tpu.pipeline_mode<synchronous>, transform_indices = @transform_2, window_bounds = array<i64: 8, 1>}, {transform_indices = @transform_3, window_bounds = array<i64: 1, 8, 128>}]} {
    %c0 = arith.constant 0 : index
    %c0_0 = arith.constant 0 : index
    %0 = vector.load %arg3[%c0, %c0_0] : memref<8x16xf32, #tpu.memory_space<vmem>>, vector<8x16xf32>
    %c0_1 = arith.constant 0 : index
    %c0_2 = arith.constant 0 : index
    %c0_3 = arith.constant 0 : index
    %1 = vector.load %arg2[%c0_1, %c0_2, %c0_3] : memref<1x16x128xf32, #tpu.memory_space<vmem>>, vector<1x16x128xf32>
    %2 = vector.shape_cast %1 : vector<1x16x128xf32> to vector<16x128xf32>
    %cst = arith.constant dense<0.000000e+00> : vector<8x128xf32>
    %3 = tpu.matmul %0, %2, %cst {dimension_numbers = #tpu.dot_dimension_numbers<[1], [0], [0], [1], [0, 0, 1, 1], [], []>} : vector<8x16xf32>, vector<16x128xf32>, vector<8x128xf32> -> vector<8x128xf32>
    %c0_4 = arith.constant 0 : index
    %c0_5 = arith.constant 0 : index
    %4 = vector.load %arg4[%c0_4, %c0_5] : memref<8x1xf32, #tpu.memory_space<vmem>>, vector<8x1xf32>
    %5 = vector.broadcast %4 : vector<8x1xf32> to vector<8x128xf32>
    %6 = arith.addf %3, %5 : vector<8x128xf32>
    %cst_6 = arith.constant 0.000000e+00 : f32
    %7 = vector.broadcast %cst_6 : f32 to vector<8x128xf32>
    %8 = arith.maximumf %6, %7 : vector<8x128xf32>
    %c0_7 = arith.constant 0 : index
    %c0_8 = arith.constant 0 : index
    %c0_9 = arith.constant 0 : index
    %9 = vector.load %arg5[%c0_7, %c0_8, %c0_9] : memref<1x8x128xf32, #tpu.memory_space<vmem>>, vector<1x8x128xf32>
    %10 = vector.shape_cast %9 : vector<1x8x128xf32> to vector<8x128xf32>
    %11 = vector.shape_cast %8 : vector<8x128xf32> to vector<1x8x128xf32>
    tpu.vector_store %arg5[%c0_7, %c0_8, %c0_9], %11 {strides = array<i32>} : memref<1x8x128xf32, #tpu.memory_space<vmem>>, vector<1x8x128xf32>,
    return
  }
  func.func @transform_0(%arg0: i32, %arg1: i32) -> (i32, i32, i32) {
    %c0_i32 = arith.constant 0 : i32
    %c0_i32_0 = arith.constant 0 : i32
    return %arg0, %c0_i32, %arg1 : i32, i32, i32
  }
  func.func @transform_1(%arg0: i32, %arg1: i32) -> (i32, i32) {
    %c0_i32 = arith.constant 0 : i32
    %c0_i32_0 = arith.constant 0 : i32
    %c0_i32_1 = arith.constant 0 : i32
    return %c0_i32, %c0_i32_0 : i32, i32
  }
  func.func @transform_2(%arg0: i32, %arg1: i32) -> (i32, i32) {
    %c0_i32 = arith.constant 0 : i32
    %c0_i32_0 = arith.constant 0 : i32
    %c0_i32_1 = arith.constant 0 : i32
    return %c0_i32, %c0_i32_0 : i32, i32
  }
  func.func @transform_3(%arg0: i32, %arg1: i32) -> (i32, i32, i32) {
    %c0_i32 = arith.constant 0 : i32
    %c0_i32_0 = arith.constant 0 : i32
    return %arg0, %c0_i32, %arg1 : i32, i32, i32
  }
}

</mosaic_0001>

<llo_original>
// kernel: tpu_custom_call.1
$region0: #{tpu_custom_call.1}
  #allocation0 [shape = 'u32[]', space=smem, size = 0x4, offset = 0x4, fixed_abs, tag = 'smem constant byte address 0x4 - core index']
  #allocation1 [shape = 'u32[144,128]{1,0:T(1,128)}', space=vmem, size = 0x12000, scoped, tag = 'internal scratch']
  %s0 = inlined_call_operand.hbm [shape: f32[2,16,128], index: 0, kind: input, shape index: {}]
  %s1 = inlined_call_operand.vmem [shape: f32[8,16], index: 1, kind: input, shape index: {}]
  %s2 = inlined_call_operand.vmem [shape: f32[8,1], index: 2, kind: input, shape index: {}]
  %s3 = inlined_call_operand.hbm [shape: f32[2,8,128], index: 3, kind: output, shape index: {}]
  %s4 = sld [smem:[#allocation0]]
  $region49: #{tpu_custom_call.1} parent=0
    _
  %s6 = ssub.s32 1, %s4
  %s7 = scalar_select 0, %s6, %s4
  $region1: #{tpu_custom_call.1} parent=0
    #allocation2 [shape = 'u8[16384]{0}', space=vmem, size = 0x4000, scoped, tag = 'input window, operand 0']
    #allocation3 [shape = 's32[2]{0}', space=sflag, size = 0x8, scoped, tag = 'scoped memory for tpu_custom_call.1']
    #allocation4 [shape = 's32[2]{0}', space=sflag, size = 0x8, scoped, tag = 'scoped memory for tpu_custom_call.1']
    #allocation5 [shape = 'u8[8192]{0}', space=vmem, size = 0x2000, scoped, tag = 'output window, operand 0']
    %8 = vsyncpa [#allocation3], 0
    %s9 = scalar_lea.sflag [#allocation3], 1
    %10 = vsyncpa %s9, 0
    %11 = vsyncpa [#allocation4], 0
    %s12 = scalar_lea.sflag [#allocation4], 1
    %13 = vsyncpa %s12, 0
    loop: start=0, step=1, limit=4
    $region2: #{tpu_custom_call.1} parent=1 // loop_pre_header
      _
    $region3: #{tpu_custom_call.1} parent=1 // loop_header
      %s15 = sphi 0, %s19
      %p16 = scmp.ge.s32.totalorder %s15, 4
      %s22 = sphi 0, %s34
      %s23 = sphi 0, %s30
      %s24 = sphi 0, %s22
      %s25 = sphi 0, %s23
      %s26 = sphi 0, %s24
      %s27 = sphi 0, %s25
      %s39 = sphi 0, %s41
      %s42 = sphi 0, %s39
      %s43 = sphi 0, %s42
      %s59 = sphi 0, %s43
      %s63 = sphi 0, %s63
      %s65 = sphi 0, %s63
      %s66 = sphi 0, %s65
      %s80 = sphi 0, %s66
      %s84 = sphi 0, %s84
      %s86 = sphi 0, %s84
      %s87 = sphi 0, %s86
      %s101 = sphi 0, %s87
      %s109 = sphi 0, %s111
      %s112 = sphi 0, %s109
      %s113 = sphi 0, %s112
      %s129 = sphi 0, %s113
    $region4: #{tpu_custom_call.1} parent=1 // loop_header_branch
      %18 = sbr.rel (%p16) target = $region8
    $region5: #{tpu_custom_call.1} parent=1 // loop_body
      %s20 = ssub.s32 %s15, 1
      %s21 = ssub.s32 %s15, 2
      %s28 = sadd.s32 1, %s23
      %p29 = scmp.ge.s32.totalorder %s28, 1
      %s30 = scalar_select %p29, 0, %s28
      %s31 = sadd.s32 1, %s22
      %s32 = scalar_select %p29, %s31, %s22
      %p33 = scmp.ge.s32.totalorder %s32, 2
      %s34 = scalar_select %p33, 0, %s32
      %s35 = ssub.s32 %s22, %s34
      %s36 = ssub.s32 %s23, %s30
      %s37 = sor.u32 %s35, %s36
      %p38 = scmp.eq.s32.totalorder %s37, 0
      %s40 = sadd.s32 %s39, 1
      %s41 = scalar_select %p38, %s39, %s40
      %p44 = pneg %p38
      %p45 = scmp.eq.s32.totalorder %s15, 1
      %p46 = por %p44, %p45
      %p47 = scmp.ne.s32.totalorder %s39, %s42
      %p48 = scmp.eq.s32.totalorder %s15, 0
      %p49 = por %p47, %p48
      %p50 = scmp.ne.s32.totalorder %s39, %s42
      %p51 = scmp.eq.s32.totalorder %s20, 1
      %p52 = por %p50, %p51
      %p53 = scmp.ne.s32.totalorder %s42, %s43
      %p54 = scmp.eq.s32.totalorder %s20, 0
      %p55 = por %p53, %p54
      %p56 = scmp.ne.s32.totalorder %s42, %s43
      %p57 = scmp.eq.s32.totalorder %s21, 1
      %p58 = por %p56, %p57
      %p60 = scmp.ne.s32.totalorder %s43, %s59
      %p61 = scmp.eq.s32.totalorder %s21, 0
      %p62 = por %p60, %p61
      %s64 = sadd.s32 %s63, 1
      %p67 = scmp.eq.s32.totalorder %s15, 1
      %p68 = scmp.ne.s32.totalorder %s63, %s65
      %p69 = scmp.eq.s32.totalorder %s15, 0
      %p70 = por %p68, %p69
      %p71 = scmp.ne.s32.totalorder %s63, %s65
      %p72 = scmp.eq.s32.totalorder %s20, 1
      %p73 = por %p71, %p72
      %p74 = scmp.ne.s32.totalorder %s65, %s66
      %p75 = scmp.eq.s32.totalorder %s20, 0
      %p76 = por %p74, %p75
      %p77 = scmp.ne.s32.totalorder %s65, %s66
      %p78 = scmp.eq.s32.totalorder %s21, 1
      %p79 = por %p77, %p78
      %p81 = scmp.ne.s32.totalorder %s66, %s80
      %p82 = scmp.eq.s32.totalorder %s21, 0
      %p83 = por %p81, %p82
      %s85 = sadd.s32 %s84, 1
      %p88 = scmp.eq.s32.totalorder %s15, 1
      %p89 = scmp.ne.s32.totalorder %s84, %s86
      %p90 = scmp.eq.s32.totalorder %s15, 0
      %p91 = por %p89, %p90
      %p92 = scmp.ne.s32.totalorder %s84, %s86
      %p93 = scmp.eq.s32.totalorder %s20, 1
      %p94 = por %p92, %p93
      %p95 = scmp.ne.s32.totalorder %s86, %s87
      %p96 = scmp.eq.s32.totalorder %s20, 0
      %p97 = por %p95, %p96
      %p98 = scmp.ne.s32.totalorder %s86, %s87
      %p99 = scmp.eq.s32.totalorder %s21, 1
      %p100 = por %p98, %p99
      %p102 = scmp.ne.s32.totalorder %s87, %s101
      %p103 = scmp.eq.s32.totalorder %s21, 0
      %p104 = por %p102, %p103
      %s105 = ssub.s32 %s22, %s34
      %s106 = ssub.s32 %s23, %s30
      %s107 = sor.u32 %s105, %s106
      %p108 = scmp.eq.s32.totalorder %s107, 0
      %s110 = sadd.s32 %s109, 1
      %s111 = scalar_select %p108, %s109, %s110
      %p114 = pneg %p108
      %p115 = scmp.eq.s32.totalorder %s15, 1
      %p116 = por %p114, %p115
      %p117 = scmp.ne.s32.totalorder %s109, %s112
      %p118 = scmp.eq.s32.totalorder %s15, 0
      %p119 = por %p117, %p118
      %p120 = scmp.ne.s32.totalorder %s109, %s112
      %p121 = scmp.eq.s32.totalorder %s20, 1
      %p122 = por %p120, %p121
      %p123 = scmp.ne.s32.totalorder %s112, %s113
      %p124 = scmp.eq.s32.totalorder %s20, 0
      %p125 = por %p123, %p124
      %p126 = scmp.ne.s32.totalorder %s112, %s113
      %p127 = scmp.eq.s32.totalorder %s21, 1
      %p128 = por %p126, %p127
      %p130 = scmp.ne.s32.totalorder %s113, %s129
      %p131 = scmp.eq.s32.totalorder %s21, 0
      %p132 = por %p130, %p131
      %p133 = scmp.le.s32.totalorder 1, %s15
      %p134 = scmp.lt.s32.totalorder %s15, 3
      %p135 = pnand %p133, %p134
      %p136 = pneg %p135
      // Predicated region
      $region9: #{tpu_custom_call.1} parent=5 // pred_check
        _
      $region10: #{tpu_custom_call.1} parent=5 // pred_check_branch
        %138 = sbr.rel (%p135) target = $region12
      $region11: #{tpu_custom_call.1} parent=5 // pred_region
        %s139 = ssub.s32 %s15, 1
        // Predicated region
        $region13: #{tpu_custom_call.1} parent=11 // pred_check
          %p140 = pneg %p76
        $region14: #{tpu_custom_call.1} parent=11 // pred_check_branch
          %142 = sbr.rel (%p140) target = $region16
        $region15: #{tpu_custom_call.1} parent=11 // pred_region
          _
        $region16: #{tpu_custom_call.1} parent=11 // pred_fallthru
          _
        // Predicated region
        $region17: #{tpu_custom_call.1} parent=11 // pred_check
          %p143 = pneg %p97
        $region18: #{tpu_custom_call.1} parent=11 // pred_check_branch
          %145 = sbr.rel (%p143) target = $region20
        $region19: #{tpu_custom_call.1} parent=11 // pred_region
          _
        $region20: #{tpu_custom_call.1} parent=11 // pred_fallthru
          _
      $region12: #{tpu_custom_call.1} parent=5 // pred_fallthru
        _
      %p146 = scmp.lt.s32.totalorder %s15, 2
      // Predicated region
      $region21: #{tpu_custom_call.1} parent=5 // pred_check
        %p147 = pneg %p146
      $region22: #{tpu_custom_call.1} parent=5 // pred_check_branch
        %149 = sbr.rel (%p147) target = $region24
      $region23: #{tpu_custom_call.1} parent=5 // pred_region
        // Predicated region
        $region25: #{tpu_custom_call.1} parent=23 // pred_check
          %p150 = pneg %p49
        $region26: #{tpu_custom_call.1} parent=23 // pred_check_branch
          %152 = sbr.rel (%p150) target = $region28
        $region27: #{tpu_custom_call.1} parent=23 // pred_region
          %s153 = sand.u32 %s39, 1
          %s154 = scalar_lea.sflag [#allocation3], %s153
          %s155 = sand.u32 %s39, 1
          %s156 = smul.addr %s155, 16
          %s157 = scalar_lea.vmem [#allocation2], %s156
          %s159 = ssub.s32 256, 256
          %160 = vsyncadd %s154, %s159
          %s161 = smul.addr %s22, 2
          %s162 = sadd.s32 %s23, %s161
          %s163 = smul.addr %s162, 128
          %s164 = scalar_lea.hbm %s0, %s163
          %s165 = sshll.u32 %s157, 4
          %s166 = int_to_ptr.vmem [resolvable:$true] %s165
          %171 = dma.hbm_to_vmem [thread:$0]  %s164, 256, %s166, %s154, 128, 128, 8
        $region28: #{tpu_custom_call.1} parent=23 // pred_fallthru
          _
      $region24: #{tpu_custom_call.1} parent=5 // pred_fallthru
        _
      %p172 = scmp.le.s32.totalorder 1, %s15
      %p173 = scmp.lt.s32.totalorder %s15, 3
      %p174 = pnand %p172, %p173
      %p175 = pneg %p174
      // Predicated region
      $region29: #{tpu_custom_call.1} parent=5 // pred_check
        _
      $region30: #{tpu_custom_call.1} parent=5 // pred_check_branch
        %177 = sbr.rel (%p174) target = $region32
      $region31: #{tpu_custom_call.1} parent=5 // pred_region
        %s178 = ssub.s32 %s15, 1
        %s179 = sand.u32 %s42, 1
        %s180 = scalar_lea.sflag [#allocation3], %s179
        %s181 = sand.u32 %s42, 1
        %s182 = smul.addr %s181, 16
        %s183 = scalar_lea.vmem [#allocation2], %s182
        // Predicated region
        $region33: #{tpu_custom_call.1} parent=31 // pred_check
          %p184 = pneg %p55
        $region34: #{tpu_custom_call.1} parent=31 // pred_check_branch
          %186 = sbr.rel (%p184) target = $region36
        $region35: #{tpu_custom_call.1} parent=31 // pred_region
          %187 = dma.done %s180, 256
        $region36: #{tpu_custom_call.1} parent=31 // pred_fallthru
          _
        %s188 = sand.u32 %s42, 1
        %s189 = scalar_lea.sflag [#allocation3], %s188
        %s190 = sand.u32 %s42, 1
        %s191 = smul.addr %s190, 16
        %s192 = scalar_lea.vmem [#allocation2], %s191
        %p193 = pneg %p55
        %p194 = pneg %p52
        %p195 = pneg %p76
        %p196 = pneg %p73
        %p197 = pneg %p97
        %p198 = pneg %p94
        %p199 = pneg %p125
        %p200 = pneg %p122
        %s201 = sand.u32 %s112, 1
        %s202 = scalar_lea.sflag [#allocation4], %s201
        %s203 = sand.u32 %s112, 1
        %s204 = smul.addr %s203, 8
        %s205 = scalar_lea.vmem [#allocation5], %s204
        %v206 = vld [vmem:[%s1] sm:$0xff]
        %v207 = vld [vmem:[%s183] sm:$0xff]
        %v208 = vld [vmem:[%s183 + $0x8] sm:$0xff]
        %v209 = vld [vmem:[%s2] sm:$0xff]
        %211 = vset.pattern.permute.xlu0 0
        %212 = vperm.xlu0 %211, %v209
        %v213 = vpop.permute.xlu0 %212
        %vm215 = vcmask 130048
        %v217 = vsel %vm215, %v206, 0
        %219 = vmatprep.subr.mxu0 0.0
        %220 = vmatpush1.msra.mxu0 0.0
        %221 = vmatprep.subr.mxu0 0.0
        %222 = vmatpush1.msra.mxu0 0.0
        %223 = vmatprep.subr.mxu0 0.0
        %224 = vmatpush1.msra.mxu0 0.0
        %225 = vmatprep.subr.mxu0 0.0
        %226 = vmatpush1.msra.mxu0 0.0
        %227 = vmatprep.subr.mxu0 0.0
        %228 = vmatpush1.msra.mxu0 0.0
        %229 = vmatprep.subr.mxu0 0.0
        %230 = vmatpush1.msra.mxu0 0.0
        %231 = vmatprep.subr.mxu0 0.0
        %232 = vmatpush1.msra.mxu0 0.0
        %233 = vmatprep.subr.mxu0 0.0
        %234 = vmatpush1.msra.mxu0 0.0
        %235 = vmatprep.subr.mxu0 0.0
        %236 = vmatpush1.msra.mxu0 0.0
        %237 = vmatprep.subr.mxu0 0.0
        %238 = vmatpush1.msra.mxu0 0.0
        %239 = vmatprep.subr.mxu0 0.0
        %240 = vmatpush1.msra.mxu0 0.0
        %241 = vmatprep.subr.mxu0 0.0
        %242 = vmatpush1.msra.mxu0 0.0
        %243 = vmatprep.subr.mxu0 0.0
        %244 = vmatpush1.msra.mxu0 0.0
        %245 = vmatprep.subr.mxu0 0.0
        %246 = vmatpush1.msra.mxu0 0.0
        %247 = vmatprep.subr.mxu0 0.0
        %248 = vmatpush1.msra.mxu0 %v208
        %249 = vmatprep.subr.mxu0 0.0
        %250 = vmatpush1.msra.mxu0 %v207
        %251 = vmatprep.subr.mxu0 0.0
        %252 = vmatpush2.msra.mxu0 0.0
        %253 = vmatprep.subr.mxu0 0.0
        %254 = vmatpush2.msra.mxu0 0.0
        %255 = vmatprep.subr.mxu0 0.0
        %256 = vmatpush2.msra.mxu0 0.0
        %257 = vmatprep.subr.mxu0 0.0
        %258 = vmatpush2.msra.mxu0 0.0
        %259 = vmatprep.subr.mxu0 0.0
        %260 = vmatpush2.msra.mxu0 0.0
        %261 = vmatprep.subr.mxu0 0.0
        %262 = vmatpush2.msra.mxu0 0.0
        %263 = vmatprep.subr.mxu0 0.0
        %264 = vmatpush2.msra.mxu0 0.0
        %265 = vmatprep.subr.mxu0 0.0
        %266 = vmatpush2.msra.mxu0 0.0
        %267 = vmatprep.subr.mxu0 0.0
        %268 = vmatpush2.msra.mxu0 0.0
        %269 = vmatprep.subr.mxu0 0.0
        %270 = vmatpush2.msra.mxu0 0.0
        %271 = vmatprep.subr.mxu0 0.0
        %272 = vmatpush2.msra.mxu0 0.0
        %273 = vmatprep.subr.mxu0 0.0
        %274 = vmatpush2.msra.mxu0 0.0
        %275 = vmatprep.subr.mxu0 0.0
        %276 = vmatpush2.msra.mxu0 0.0
        %277 = vmatprep.subr.mxu0 0.0
        %278 = vmatpush2.msra.mxu0 0.0
        %279 = vmatprep.subr.mxu0 0.0
        %280 = vmatpush2.msra.mxu0 0.0
        %281 = vmatprep.subr.mxu0 0.0
        %282 = vmatpush2.msra.mxu0 0.0
        %283 = vmatprep.mubr.f32.mxu0 0.0
        %284 = vmatmul.mubr.f32.gmra.mxu0 %v217
        %v285 = vpop.f32.mrf.mxu0
        %v286 = vadd.f32 %v213, %v285
        %v287 = vpop.f32.mrf.mxu0
        %288 = vdwg.mxu0
        %v289 = vmax.f32 %v286, 0.0
        %290 = vst [vmem:[%s205] sm:$0xff] %v289
        %s291 = sand.u32 %s112, 1
        %s292 = scalar_lea.sflag [#allocation4], %s291
        %s293 = sand.u32 %s112, 1
        %s294 = smul.addr %s293, 8
        %s295 = scalar_lea.vmem [#allocation5], %s294
        // Predicated region
        $region37: #{tpu_custom_call.1} parent=31 // pred_check
          %p296 = pneg %p122
        $region38: #{tpu_custom_call.1} parent=31 // pred_check_branch
          %298 = sbr.rel (%p296) target = $region40
        $region39: #{tpu_custom_call.1} parent=31 // pred_region
          %s300 = ssub.s32 128, 128
          %301 = vsyncadd %s292, %s300
          %s302 = sadd.s32 %s25, %s24
          %s303 = smul.addr %s302, 128
          %s304 = scalar_lea.hbm %s3, %s303
          %s306 = sshll.u32 %s295, 4
          %s307 = int_to_ptr.vmem [resolvable:$true] %s306
          %309 = dma.vmem_to_hbm [thread:$0]  %s307, 128, %s304, %s292
        $region40: #{tpu_custom_call.1} parent=31 // pred_fallthru
          _
      $region32: #{tpu_custom_call.1} parent=5 // pred_fallthru
        _
      %p310 = scmp.le.s32.totalorder 2, %s15
      // Predicated region
      $region41: #{tpu_custom_call.1} parent=5 // pred_check
        %p311 = pneg %p310
      $region42: #{tpu_custom_call.1} parent=5 // pred_check_branch
        %313 = sbr.rel (%p311) target = $region44
      $region43: #{tpu_custom_call.1} parent=5 // pred_region
        %s314 = ssub.s32 %s15, 2
        // Predicated region
        $region45: #{tpu_custom_call.1} parent=43 // pred_check
          %p315 = pneg %p128
        $region46: #{tpu_custom_call.1} parent=43 // pred_check_branch
          %317 = sbr.rel (%p315) target = $region48
        $region47: #{tpu_custom_call.1} parent=43 // pred_region
          %s318 = sand.u32 %s113, 1
          %s319 = scalar_lea.sflag [#allocation4], %s318
          %s320 = sand.u32 %s113, 1
          %s321 = smul.addr %s320, 8
          %s322 = scalar_lea.vmem [#allocation5], %s321
          %323 = dma.done %s319, 128
        $region48: #{tpu_custom_call.1} parent=43 // pred_fallthru
          _
      $region44: #{tpu_custom_call.1} parent=5 // pred_fallthru
        _
    $region6: #{tpu_custom_call.1} parent=1 // loop_footer
      %s19 = sadd.s32 1, %s15
    $region7: #{tpu_custom_call.1} parent=1 // loop_footer_branch
      %14 = sbr.rel target = $region3
    $region8: #{tpu_custom_call.1} parent=1 // loop_exit
      _
    %324 = vsyncpa [#allocation3], 1
    %s325 = scalar_lea.sflag [#allocation3], 1
    %326 = vsyncpa %s325, 1
    %327 = vsyncpa [#allocation4], 1
    %s328 = scalar_lea.sflag [#allocation4], 1
    %329 = vsyncpa %s328, 1

</llo_original>
